<compile_context>
chip_gen: v7x
topology: tpu7x:2x2x1
jax: 0.10.0
libtpu: 0.0.40
codegen_flags: <defaults>
</compile_context>

<pallas_src>
import jax
import jax.numpy as jnp
from jax.experimental import pallas as pl
from jax.experimental.pallas import tpu as pltpu


def _square_kernel(x_ref, o_ref):
    # One vreg-wide multiply per tile on the VPU; DMA is the bottleneck.
    v = x_ref[...]
    o_ref[...] = v * v


def _choose_cols(n: int, max_cols: int) -> int:
    """Largest multiple of 128 that divides n and is <= max_cols (0 if none)."""
    best = 0
    c = 128
    limit = min(max_cols, n)
    while c <= limit:          # at most 64 trace-time iterations
        if n % c == 0:
            best = c
        c += 128
    return best


def squarer(x: jax.Array, *, max_tile_bytes: int = 8 * 1024 * 1024,
            max_cols: int = 8192) -> jax.Array:
    """Compute x**2 with a tiled, lane-dense Pallas TPU kernel (any shape/dtype)."""
    orig_shape = x.shape
    n = x.size
    if n == 0:
        return x

    itemsize = jnp.dtype(x.dtype).itemsize
    # Sublane packing: 8 rows/vreg for 32-bit, 16 for bf16, 32 for int8/fp8.
    sub = max(8, 32 // itemsize)

    flat = x.reshape(-1)

    # ---- lane (column) dimension: as wide as possible, multiple of 128 -----
    cols = _choose_cols(n, max_cols)
    padded = False
    if cols == 0:
        # Ragged size (not a multiple of 128): pad the tail. Zero padding is
        # benign for squaring and is sliced off afterwards.
        cols = 1024 if n >= 1024 else 128
        n_work = pl.cdiv(n, cols) * cols
        flat = jnp.pad(flat, (0, n_work - n))
        padded = True
    else:
        n_work = n               # fast path: no padding, no trailing slice
    rows = n_work // cols

    # ---- sublane (row) tile: target ~max_tile_bytes per block --------------
    target_tm = max(sub, (max_tile_bytes // (cols * itemsize)) // sub * sub)
    if rows <= target_tm:
        # Whole array fits in one block. Split in two only when it is free
        # (no padding needed) so both v7x TensorCores get work.
        if rows >= 2 * sub and rows % 2 == 0 and (rows // 2) % sub == 0:
            tm = rows // 2
        else:
            tm = rows            # block equals full row extent -> layout-legal
    else:
        tm = target_tm

    rows_p = pl.cdiv(rows, tm) * tm
    x2d = flat.reshape(rows, cols)
    if rows_p != rows:
        x2d = jnp.pad(x2d, ((0, rows_p - rows), (0, 0)))
        padded = True

    grid = (rows_p // tm,)

    # VMEM budget: 2 arrays x 2 pipeline buffers x tile, plus headroom.
    tile_bytes = tm * cols * itemsize
    vmem_limit = int(min(max(4 * tile_bytes + (8 << 20), 32 << 20), 120 << 20))

    out = pl.pallas_call(
        _square_kernel,
        out_shape=jax.ShapeDtypeStruct((rows_p, cols), x.dtype),
        grid=grid,
        in_specs=[pl.BlockSpec((tm, cols), lambda i: (i, 0))],
        out_specs=pl.BlockSpec((tm, cols), lambda i: (i, 0)),
        compiler_params=pltpu.CompilerParams(
            dimension_semantics=("parallel",),
            vmem_limit_bytes=vmem_limit,
        ),
    )(x2d)

    if padded:
        return out.reshape(-1)[:n].reshape(orig_shape)
    return out.reshape(orig_shape)


if __name__ == "__main__":
    key = jax.random.PRNGKey(0)
    # Small NCHW-like activation: batch=2, channels=4, 16x16 spatial.
    x = jax.random.normal(key, (2, 4, 16, 16), dtype=jnp.float32)

    y = squarer(x)
    jax.block_until_ready(y)

    ref = x ** 2
    assert y.shape == ref.shape and y.dtype == ref.dtype
    assert jnp.allclose(y, ref, atol=1e-6, rtol=1e-6)

    print("KERNEL_OK")
</pallas_src>

<mosaic_0001>
module attributes {stable_mosaic.version = 11 : i64} {
  func.func @_square_kernel(%arg0: i32, %arg1: memref<1x2048xf32, #tpu.memory_space<vmem>>, %arg2: memref<1x2048xf32, #tpu.memory_space<vmem>>) attributes {dimension_semantics = [#tpu.dimension_semantics<parallel>], iteration_bounds = array<i64: 1>, scalar_prefetch = 0 : i64, scratch_operands = 0 : i64, tpu.core_type = #tpu.core_type<tc>, window_params = [{transform_indices = @transform_0, window_bounds = array<i64: 1, 2048>}, {transform_indices = @transform_1, window_bounds = array<i64: 1, 2048>}]} {
    %c0 = arith.constant 0 : index
    %c0_0 = arith.constant 0 : index
    %0 = vector.load %arg1[%c0, %c0_0] : memref<1x2048xf32, #tpu.memory_space<vmem>>, vector<1x2048xf32>
    %1 = arith.mulf %0, %0 : vector<1x2048xf32>
    %c0_1 = arith.constant 0 : index
    %c0_2 = arith.constant 0 : index
    %2 = vector.load %arg2[%c0_1, %c0_2] : memref<1x2048xf32, #tpu.memory_space<vmem>>, vector<1x2048xf32>
    tpu.vector_store %arg2[%c0_1, %c0_2], %1 {strides = array<i32>} : memref<1x2048xf32, #tpu.memory_space<vmem>>, vector<1x2048xf32>,
    return
  }
  func.func @transform_0(%arg0: i32) -> (i32, i32) {
    %c0_i32 = arith.constant 0 : i32
    %c0_i32_0 = arith.constant 0 : i32
    return %arg0, %c0_i32 : i32, i32
  }
  func.func @transform_1(%arg0: i32) -> (i32, i32) {
    %c0_i32 = arith.constant 0 : i32
    %c0_i32_0 = arith.constant 0 : i32
    return %arg0, %c0_i32 : i32, i32
  }
}

</mosaic_0001>

<llo_original>
// kernel: tpu_custom_call.1
$region0: #{tpu_custom_call.1}
  #allocation0 [shape = 'u32[]', space=smem, size = 0x4, offset = 0x4, fixed_abs, tag = 'smem constant byte address 0x4 - core index']
  #allocation1 [shape = 'u32[144,128]{1,0:T(1,128)}', space=vmem, size = 0x12000, scoped, tag = 'internal scratch']
  %s0 = inlined_call_operand.hbm [shape: f32[1,2048], index: 0, kind: input, shape index: {}]
  %s1 = inlined_call_operand.hbm [shape: f32[1,2048], index: 1, kind: output, shape index: {}]
  %s2 = sld [smem:[#allocation0]]
  $region18: #{tpu_custom_call.1} parent=0
    _
  %s4 = ssub.s32 1, %s2
  %s5 = scalar_select 0, %s4, %s2
  $region1: #{tpu_custom_call.1} parent=0
    #allocation2 [shape = 'u8[8192]{0}', space=vmem, size = 0x2000, scoped, tag = 'input window, operand 0, single buffered']
    #allocation3 [shape = 's32[1]{0}', space=sflag, size = 0x4, scoped, tag = 'scoped memory for tpu_custom_call.1']
    #allocation4 [shape = 's32[1]{0}', space=sflag, size = 0x4, scoped, tag = 'scoped memory for tpu_custom_call.1']
    #allocation5 [shape = 'u8[8192]{0}', space=vmem, size = 0x2000, scoped, tag = 'output window, operand 0, single buffered']
    %6 = vsyncpa [#allocation3], 0
    %7 = vsyncpa [#allocation4], 0
    // Predicated region
    $region2: #{tpu_custom_call.1} parent=1 // pred_check
      _
    $region3: #{tpu_custom_call.1} parent=1 // pred_check_branch
      %9 = sbr.rel (0) target = $region5
    $region4: #{tpu_custom_call.1} parent=1 // pred_region
      %s11 = ssub.s32 256, 256
      %12 = vsyncadd [#allocation3], %s11
      %s14 = sshll.u32 [#allocation2], 4
      %s15 = int_to_ptr.vmem [resolvable:$true] %s14
      %17 = dma.hbm_to_vmem [thread:$0]  %s0, 256, %s15, [#allocation3]
    $region5: #{tpu_custom_call.1} parent=1 // pred_fallthru
      _
    // Predicated region
    $region6: #{tpu_custom_call.1} parent=1 // pred_check
      _
    $region7: #{tpu_custom_call.1} parent=1 // pred_check_branch
      %19 = sbr.rel (0) target = $region9
    $region8: #{tpu_custom_call.1} parent=1 // pred_region
      %20 = dma.done [#allocation3], 256
    $region9: #{tpu_custom_call.1} parent=1 // pred_fallthru
      _
    %v21 = vld [vmem:[#allocation2] sm:$0xff]
    %v22 = vld [vmem:[#allocation2 + $0x8] sm:$0xff]
    %v23 = vmul.f32 %v21, %v21
    %v24 = vmul.f32 %v22, %v22
    %25 = vst [vmem:[#allocation5] sm:$0xff] %v23
    %26 = vst [vmem:[#allocation5 + $0x8] sm:$0xff] %v24
    // Predicated region
    $region10: #{tpu_custom_call.1} parent=1 // pred_check
      _
    $region11: #{tpu_custom_call.1} parent=1 // pred_check_branch
      %28 = sbr.rel (0) target = $region13
    $region12: #{tpu_custom_call.1} parent=1 // pred_region
      %s30 = ssub.s32 256, 256
      %31 = vsyncadd [#allocation4], %s30
      %s33 = sshll.u32 [#allocation5], 4
      %s34 = int_to_ptr.vmem [resolvable:$true] %s33
      %36 = dma.vmem_to_hbm [thread:$0]  %s34, 256, %s1, [#allocation4]
    $region13: #{tpu_custom_call.1} parent=1 // pred_fallthru
      _
    // Predicated region
    $region14: #{tpu_custom_call.1} parent=1 // pred_check
      _
    $region15: #{tpu_custom_call.1} parent=1 // pred_check_branch
      %38 = sbr.rel (0) target = $region17
    $region16: #{tpu_custom_call.1} parent=1 // pred_region
      %39 = dma.done [#allocation4], 256
    $region17: #{tpu_custom_call.1} parent=1 // pred_fallthru
      _
    %40 = vsyncpa [#allocation3], 1
    %41 = vsyncpa [#allocation4], 1

</llo_original>
